<compile_context>
chip_gen: v7x
topology: tpu7x:2x2x1
jax: 0.10.0
libtpu: 0.0.40
codegen_flags: <defaults>
</compile_context>

<pallas_src>
import jax
import jax.numpy as jnp
from jax import lax
from jax.experimental import pallas as pl
from jax.experimental.pallas import tpu as pltpu  # noqa: F401  (TPU backend)


def _conv1x1_kernel(x_ref, w_ref, b_ref, o_ref):
    # x_ref: (M, C), w_ref: (O, C), b_ref: (1, O), o_ref: (M, O)
    # Contract the channel dim of x against the channel dim of the
    # natively-laid-out (O, C) weight -> (M, O), accumulate in f32 on the MXU.
    acc = lax.dot_general(
        x_ref[...],
        w_ref[...],
        dimension_numbers=(((1,), (1,)), ((), ())),
        preferred_element_type=jnp.float32,
    )
    o_ref[...] = (acc + b_ref[...]).astype(o_ref.dtype)


def conv2d_1x1(x_nchw, weight_ocij, bias_o):
    """1x1 stride-1 conv (NCHW, bias) via a single-block Pallas matmul kernel."""
    n, c, h, w = x_nchw.shape
    o = weight_ocij.shape[0]
    m = n * h * w

    # (N, C, H, W) -> (M, C).  With H == W == 1 this is an exact reshape
    # (no data movement); otherwise fall back to an NHWC transpose.
    if h == 1 and w == 1:
        x_mat = x_nchw.reshape(m, c)
    else:
        x_mat = jnp.transpose(x_nchw, (0, 2, 3, 1)).reshape(m, c)

    # Keep the weight in its native (O, C) layout: no transpose, one clean DMA.
    w_mat = weight_ocij.reshape(o, c)
    b_mat = bias_o.reshape(1, o)

    # Single block, no grid: whole arrays land in VMEM, no pipelining overhead.
    out_mat = pl.pallas_call(
        _conv1x1_kernel,
        out_shape=jax.ShapeDtypeStruct((m, o), x_mat.dtype),
    )(x_mat, w_mat, b_mat)

    # (M, O) -> (N, O, H, W)
    if h == 1 and w == 1:
        return out_mat.reshape(n, o, h, w)
    return jnp.transpose(out_mat.reshape(n, h, w, o), (0, 3, 1, 2))


if __name__ == "__main__":
    key = jax.random.PRNGKey(0)
    k_x, k_w, k_b = jax.random.split(key, 3)

    N, C_IN, C_OUT, H, W = 1, 2064, 86, 1, 1

    # Deterministic synthetic input and parameters (module-consistent shapes).
    x538 = jax.random.normal(k_x, (N, C_IN, H, W), dtype=jnp.float32)
    weight = jax.random.normal(k_w, (C_OUT, C_IN, 1, 1), dtype=jnp.float32) * 0.02
    bias = jax.random.normal(k_b, (C_OUT,), dtype=jnp.float32) * 0.02

    conv_jit = jax.jit(conv2d_1x1)
    y = conv_jit(x538, weight, bias)
    jax.block_until_ready(y)

    # Sanity check against plain-JAX reference (same math as torch Conv2d 1x1).
    ref = (
        jnp.einsum("nchw,oc->nohw", x538, weight.reshape(C_OUT, C_IN))
        + bias.reshape(1, C_OUT, 1, 1)
    )
    assert y.shape == (N, C_OUT, H, W)
    assert jnp.allclose(y, ref, atol=1e-4, rtol=1e-4)

    print("KERNEL_OK")
</pallas_src>

<mosaic_0001>
module attributes {stable_mosaic.version = 11 : i64} {
  func.func @_conv1x1_kernel(%arg0: memref<1x2064xf32, #tpu.memory_space<vmem>>, %arg1: memref<86x2064xf32, #tpu.memory_space<vmem>>, %arg2: memref<1x86xf32, #tpu.memory_space<vmem>>, %arg3: memref<1x86xf32, #tpu.memory_space<vmem>>) attributes {dimension_semantics = [], scalar_prefetch = 0 : i64, scratch_operands = 0 : i64, tpu.core_type = #tpu.core_type<tc>} {
    %c0 = arith.constant 0 : index
    %c0_0 = arith.constant 0 : index
    %0 = vector.load %arg0[%c0, %c0_0] : memref<1x2064xf32, #tpu.memory_space<vmem>>, vector<1x2064xf32>
    %c0_1 = arith.constant 0 : index
    %c0_2 = arith.constant 0 : index
    %1 = vector.load %arg1[%c0_1, %c0_2] : memref<86x2064xf32, #tpu.memory_space<vmem>>, vector<86x2064xf32>
    %cst = arith.constant dense<0.000000e+00> : vector<1x86xf32>
    %2 = tpu.matmul %0, %1, %cst {dimension_numbers = #tpu.dot_dimension_numbers<[1], [1], [0], [0], [0, 0, 1, 0], [], []>} : vector<1x2064xf32>, vector<86x2064xf32>, vector<1x86xf32> -> vector<1x86xf32>
    %c0_3 = arith.constant 0 : index
    %c0_4 = arith.constant 0 : index
    %3 = vector.load %arg2[%c0_3, %c0_4] : memref<1x86xf32, #tpu.memory_space<vmem>>, vector<1x86xf32>
    %4 = arith.addf %2, %3 : vector<1x86xf32>
    %c0_5 = arith.constant 0 : index
    %c0_6 = arith.constant 0 : index
    %5 = vector.load %arg3[%c0_5, %c0_6] : memref<1x86xf32, #tpu.memory_space<vmem>>, vector<1x86xf32>
    tpu.vector_store %arg3[%c0_5, %c0_6], %4 {strides = array<i32>} : memref<1x86xf32, #tpu.memory_space<vmem>>, vector<1x86xf32>,
    return
  }
}

</mosaic_0001>

<llo_original>
// kernel: conv2d_1x1.1
$region0: #{conv2d_1x1.1}
  #allocation0 [shape = 'u32[]', space=smem, size = 0x4, offset = 0x4, fixed_abs, tag = 'smem constant byte address 0x4 - core index']
  #allocation1 [shape = 'u32[144,128]{1,0:T(1,128)}', space=vmem, size = 0x12000, scoped, tag = 'internal scratch']
  %s0 = inlined_call_operand.vmem [shape: f32[1,2064], index: 0, kind: input, shape index: {}]
  %s1 = inlined_call_operand.vmem [shape: f32[86,2064], index: 1, kind: input, shape index: {}]
  %s2 = inlined_call_operand.vmem [shape: f32[1,86], index: 2, kind: input, shape index: {}]
  %s3 = inlined_call_operand.hbm [shape: f32[1,86], index: 3, kind: output, shape index: {}]
  %s4 = sld [smem:[#allocation0]]
  $region22: #{conv2d_1x1.1} parent=0
    _
  %s6 = ssub.s32 1, %s4
  %s7 = scalar_select 0, %s6, %s4
  $region1: #{conv2d_1x1.1} parent=0
    #allocation2 [shape = 'u8[512]{0}', space=vmem, size = 0x400, scoped, tag = 'output window, operand 0, single buffered']
    #allocation3 [shape = 's32[1]{0}', space=sflag, size = 0x4, scoped, tag = 'scoped memory for conv2d_1x1.1']
    %8 = vsyncpa [#allocation3], 0
    // Predicated region
    $region2: #{conv2d_1x1.1} parent=1 // pred_check
      _
    $region3: #{conv2d_1x1.1} parent=1 // pred_check_branch
      %10 = sbr.rel (0) target = $region5
    $region4: #{conv2d_1x1.1} parent=1 // pred_region
      _
    $region5: #{conv2d_1x1.1} parent=1 // pred_fallthru
      _
    // Predicated region
    $region6: #{conv2d_1x1.1} parent=1 // pred_check
      _
    $region7: #{conv2d_1x1.1} parent=1 // pred_check_branch
      %12 = sbr.rel (0) target = $region9
    $region8: #{conv2d_1x1.1} parent=1 // pred_region
      _
    $region9: #{conv2d_1x1.1} parent=1 // pred_fallthru
      _
    // Predicated region
    $region10: #{conv2d_1x1.1} parent=1 // pred_check
      _
    $region11: #{conv2d_1x1.1} parent=1 // pred_check_branch
      %14 = sbr.rel (0) target = $region13
    $region12: #{conv2d_1x1.1} parent=1 // pred_region
      _
    $region13: #{conv2d_1x1.1} parent=1 // pred_fallthru
      _
    %v15 = vld [vmem:[%s0] sm:$0xff]
    %v16 = vld [vmem:[%s0 + $0x8] sm:$0xff]
    %v17 = vld [vmem:[%s0 + $0x10] sm:$0x1]
    %v18 = vld [vmem:[%s1] sm:$0xff]
    %v19 = vld [vmem:[%s1 + $0x8] sm:$0xff]
    %v20 = vld [vmem:[%s1 + $0x10] sm:$0xff]
    %v21 = vld [vmem:[%s1 + $0x18] sm:$0xff]
    %v22 = vld [vmem:[%s1 + $0x20] sm:$0xff]
    %v23 = vld [vmem:[%s1 + $0x28] sm:$0xff]
    %v24 = vld [vmem:[%s1 + $0x30] sm:$0xff]
    %v25 = vld [vmem:[%s1 + $0x38] sm:$0xff]
    %v26 = vld [vmem:[%s1 + $0x40] sm:$0xff]
    %v27 = vld [vmem:[%s1 + $0x48] sm:$0xff]
    %v28 = vld [vmem:[%s1 + $0x50] sm:$0xff]
    %v29 = vld [vmem:[%s1 + $0x58] sm:$0xff]
    %v30 = vld [vmem:[%s1 + $0x60] sm:$0xff]
    %v31 = vld [vmem:[%s1 + $0x68] sm:$0xff]
    %v32 = vld [vmem:[%s1 + $0x70] sm:$0xff]
    %v33 = vld [vmem:[%s1 + $0x78] sm:$0xff]
    %v34 = vld [vmem:[%s1 + $0x80] sm:$0xff]
    %v35 = vld [vmem:[%s1 + $0x88] sm:$0xff]
    %v36 = vld [vmem:[%s1 + $0x90] sm:$0xff]
    %v37 = vld [vmem:[%s1 + $0x98] sm:$0xff]
    %v38 = vld [vmem:[%s1 + $0xa0] sm:$0xff]
    %v39 = vld [vmem:[%s1 + $0xa8] sm:$0xff]
    %v40 = vld [vmem:[%s1 + $0xb0] sm:$0xff]
    %v41 = vld [vmem:[%s1 + $0xb8] sm:$0xff]
    %v42 = vld [vmem:[%s1 + $0xc0] sm:$0xff]
    %v43 = vld [vmem:[%s1 + $0xc8] sm:$0xff]
    %v44 = vld [vmem:[%s1 + $0xd0] sm:$0xff]
    %v45 = vld [vmem:[%s1 + $0xd8] sm:$0xff]
    %v46 = vld [vmem:[%s1 + $0xe0] sm:$0xff]
    %v47 = vld [vmem:[%s1 + $0xe8] sm:$0xff]
    %v48 = vld [vmem:[%s1 + $0xf0] sm:$0xff]
    %v49 = vld [vmem:[%s1 + $0xf8] sm:$0xff]
    %v50 = vld [vmem:[%s1 + $0x100] sm:$0xff]
    %v51 = vld [vmem:[%s1 + $0x108] sm:$0xff]
    %v52 = vld [vmem:[%s1 + $0x110] sm:$0xff]
    %v53 = vld [vmem:[%s1 + $0x118] sm:$0xff]
    %v54 = vld [vmem:[%s1 + $0x120] sm:$0xff]
    %v55 = vld [vmem:[%s1 + $0x128] sm:$0xff]
    %v56 = vld [vmem:[%s1 + $0x130] sm:$0xff]
    %v57 = vld [vmem:[%s1 + $0x138] sm:$0xff]
    %v58 = vld [vmem:[%s1 + $0x140] sm:$0xff]
    %v59 = vld [vmem:[%s1 + $0x148] sm:$0xff]
    %v60 = vld [vmem:[%s1 + $0x150] sm:$0xff]
    %v61 = vld [vmem:[%s1 + $0x158] sm:$0xff]
    %v62 = vld [vmem:[%s1 + $0x160] sm:$0xff]
    %v63 = vld [vmem:[%s1 + $0x168] sm:$0xff]
    %v64 = vld [vmem:[%s1 + $0x170] sm:$0xff]
    %v65 = vld [vmem:[%s1 + $0x178] sm:$0xff]
    %v66 = vld [vmem:[%s1 + $0x180] sm:$0xff]
    %v67 = vld [vmem:[%s1 + $0x188] sm:$0xff]
    %v68 = vld [vmem:[%s1 + $0x190] sm:$0xff]
    %v69 = vld [vmem:[%s1 + $0x198] sm:$0xff]
    %v70 = vld [vmem:[%s1 + $0x1a0] sm:$0xff]
    %v71 = vld [vmem:[%s1 + $0x1a8] sm:$0xff]
    %v72 = vld [vmem:[%s1 + $0x1b0] sm:$0xff]
    %v73 = vld [vmem:[%s1 + $0x1b8] sm:$0xff]
    %v74 = vld [vmem:[%s1 + $0x1c0] sm:$0xff]
    %v75 = vld [vmem:[%s1 + $0x1c8] sm:$0xff]
    %v76 = vld [vmem:[%s1 + $0x1d0] sm:$0xff]
    %v77 = vld [vmem:[%s1 + $0x1d8] sm:$0xff]
    %v78 = vld [vmem:[%s1 + $0x1e0] sm:$0xff]
    %v79 = vld [vmem:[%s1 + $0x1e8] sm:$0xff]
    %v80 = vld [vmem:[%s1 + $0x1f0] sm:$0xff]
    %v81 = vld [vmem:[%s1 + $0x1f8] sm:$0xff]
    %v82 = vld [vmem:[%s1 + $0x200] sm:$0xff]
    %v83 = vld [vmem:[%s1 + $0x208] sm:$0xff]
    %v84 = vld [vmem:[%s1 + $0x210] sm:$0xff]
    %v85 = vld [vmem:[%s1 + $0x218] sm:$0xff]
    %v86 = vld [vmem:[%s1 + $0x220] sm:$0xff]
    %v87 = vld [vmem:[%s1 + $0x228] sm:$0xff]
    %v88 = vld [vmem:[%s1 + $0x230] sm:$0xff]
    %v89 = vld [vmem:[%s1 + $0x238] sm:$0xff]
    %v90 = vld [vmem:[%s1 + $0x240] sm:$0xff]
    %v91 = vld [vmem:[%s1 + $0x248] sm:$0xff]
    %v92 = vld [vmem:[%s1 + $0x250] sm:$0xff]
    %v93 = vld [vmem:[%s1 + $0x258] sm:$0xff]
    %v94 = vld [vmem:[%s1 + $0x260] sm:$0xff]
    %v95 = vld [vmem:[%s1 + $0x268] sm:$0xff]
    %v96 = vld [vmem:[%s1 + $0x270] sm:$0xff]
    %v97 = vld [vmem:[%s1 + $0x278] sm:$0xff]
    %v98 = vld [vmem:[%s1 + $0x280] sm:$0xff]
    %v99 = vld [vmem:[%s1 + $0x288] sm:$0xff]
    %v100 = vld [vmem:[%s1 + $0x290] sm:$0xff]
    %v101 = vld [vmem:[%s1 + $0x298] sm:$0xff]
    %v102 = vld [vmem:[%s1 + $0x2a0] sm:$0xff]
    %v103 = vld [vmem:[%s1 + $0x2a8] sm:$0xff]
    %v104 = vld [vmem:[%s1 + $0x2b0] sm:$0xff]
    %v105 = vld [vmem:[%s1 + $0x2b8] sm:$0xff]
    %v106 = vld [vmem:[%s1 + $0x2c0] sm:$0xff]
    %v107 = vld [vmem:[%s1 + $0x2c8] sm:$0xff]
    %v108 = vld [vmem:[%s1 + $0x2d0] sm:$0xff]
    %v109 = vld [vmem:[%s1 + $0x2d8] sm:$0xff]
    %v110 = vld [vmem:[%s1 + $0x2e0] sm:$0xff]
    %v111 = vld [vmem:[%s1 + $0x2e8] sm:$0xff]
    %v112 = vld [vmem:[%s1 + $0x2f0] sm:$0xff]
    %v113 = vld [vmem:[%s1 + $0x2f8] sm:$0xff]
    %v114 = vld [vmem:[%s1 + $0x300] sm:$0xff]
    %v115 = vld [vmem:[%s1 + $0x308] sm:$0xff]
    %v116 = vld [vmem:[%s1 + $0x310] sm:$0xff]
    %v117 = vld [vmem:[%s1 + $0x318] sm:$0xff]
    %v118 = vld [vmem:[%s1 + $0x320] sm:$0xff]
    %v119 = vld [vmem:[%s1 + $0x328] sm:$0xff]
    %v120 = vld [vmem:[%s1 + $0x330] sm:$0xff]
    %v121 = vld [vmem:[%s1 + $0x338] sm:$0xff]
    %v122 = vld [vmem:[%s1 + $0x340] sm:$0xff]
    %v123 = vld [vmem:[%s1 + $0x348] sm:$0xff]
    %v124 = vld [vmem:[%s1 + $0x350] sm:$0xff]
    %v125 = vld [vmem:[%s1 + $0x358] sm:$0xff]
    %v126 = vld [vmem:[%s1 + $0x360] sm:$0xff]
    %v127 = vld [vmem:[%s1 + $0x368] sm:$0xff]
    %v128 = vld [vmem:[%s1 + $0x370] sm:$0xff]
    %v129 = vld [vmem:[%s1 + $0x378] sm:$0xff]
    %v130 = vld [vmem:[%s1 + $0x380] sm:$0xff]
    %v131 = vld [vmem:[%s1 + $0x388] sm:$0xff]
    %v132 = vld [vmem:[%s1 + $0x390] sm:$0xff]
    %v133 = vld [vmem:[%s1 + $0x398] sm:$0xff]
    %v134 = vld [vmem:[%s1 + $0x3a0] sm:$0xff]
    %v135 = vld [vmem:[%s1 + $0x3a8] sm:$0xff]
    %v136 = vld [vmem:[%s1 + $0x3b0] sm:$0xff]
    %v137 = vld [vmem:[%s1 + $0x3b8] sm:$0xff]
    %v138 = vld [vmem:[%s1 + $0x3c0] sm:$0xff]
    %v139 = vld [vmem:[%s1 + $0x3c8] sm:$0xff]
    %v140 = vld [vmem:[%s1 + $0x3d0] sm:$0xff]
    %v141 = vld [vmem:[%s1 + $0x3d8] sm:$0xff]
    %v142 = vld [vmem:[%s1 + $0x3e0] sm:$0xff]
    %v143 = vld [vmem:[%s1 + $0x3e8] sm:$0xff]
    %v144 = vld [vmem:[%s1 + $0x3f0] sm:$0xff]
    %v145 = vld [vmem:[%s1 + $0x3f8] sm:$0xff]
    %v146 = vld [vmem:[%s1 + $0x400] sm:$0xff]
    %v147 = vld [vmem:[%s1 + $0x408] sm:$0xff]
    %v148 = vld [vmem:[%s1 + $0x410] sm:$0xff]
    %v149 = vld [vmem:[%s1 + $0x418] sm:$0xff]
    %v150 = vld [vmem:[%s1 + $0x420] sm:$0xff]
    %v151 = vld [vmem:[%s1 + $0x428] sm:$0xff]
    %v152 = vld [vmem:[%s1 + $0x430] sm:$0xff]
    %v153 = vld [vmem:[%s1 + $0x438] sm:$0xff]
    %v154 = vld [vmem:[%s1 + $0x440] sm:$0xff]
    %v155 = vld [vmem:[%s1 + $0x448] sm:$0xff]
    %v156 = vld [vmem:[%s1 + $0x450] sm:$0xff]
    %v157 = vld [vmem:[%s1 + $0x458] sm:$0xff]
    %v158 = vld [vmem:[%s1 + $0x460] sm:$0xff]
    %v159 = vld [vmem:[%s1 + $0x468] sm:$0xff]
    %v160 = vld [vmem:[%s1 + $0x470] sm:$0xff]
    %v161 = vld [vmem:[%s1 + $0x478] sm:$0xff]
    %v162 = vld [vmem:[%s1 + $0x480] sm:$0xff]
    %v163 = vld [vmem:[%s1 + $0x488] sm:$0xff]
    %v164 = vld [vmem:[%s1 + $0x490] sm:$0xff]
    %v165 = vld [vmem:[%s1 + $0x498] sm:$0xff]
    %v166 = vld [vmem:[%s1 + $0x4a0] sm:$0xff]
    %v167 = vld [vmem:[%s1 + $0x4a8] sm:$0xff]
    %v168 = vld [vmem:[%s1 + $0x4b0] sm:$0xff]
    %v169 = vld [vmem:[%s1 + $0x4b8] sm:$0xff]
    %v170 = vld [vmem:[%s1 + $0x4c0] sm:$0xff]
    %v171 = vld [vmem:[%s1 + $0x4c8] sm:$0xff]
    %v172 = vld [vmem:[%s1 + $0x4d0] sm:$0xff]
    %v173 = vld [vmem:[%s1 + $0x4d8] sm:$0xff]
    %v174 = vld [vmem:[%s1 + $0x4e0] sm:$0xff]
    %v175 = vld [vmem:[%s1 + $0x4e8] sm:$0xff]
    %v176 = vld [vmem:[%s1 + $0x4f0] sm:$0xff]
    %v177 = vld [vmem:[%s1 + $0x4f8] sm:$0xff]
    %v178 = vld [vmem:[%s1 + $0x500] sm:$0xff]
    %v179 = vld [vmem:[%s1 + $0x508] sm:$0xff]
    %v180 = vld [vmem:[%s1 + $0x510] sm:$0xff]
    %v181 = vld [vmem:[%s1 + $0x518] sm:$0xff]
    %v182 = vld [vmem:[%s1 + $0x520] sm:$0xff]
    %v183 = vld [vmem:[%s1 + $0x528] sm:$0xff]
    %v184 = vld [vmem:[%s1 + $0x530] sm:$0xff]
    %v185 = vld [vmem:[%s1 + $0x538] sm:$0xff]
    %v186 = vld [vmem:[%s1 + $0x540] sm:$0xff]
    %v187 = vld [vmem:[%s1 + $0x548] sm:$0xff]
    %v188 = vld [vmem:[%s1 + $0x550] sm:$0x3f]
    %v189 = vld [vmem:[%s1 + $0x558] sm:$0x3f]
    %v190 = vld [vmem:[%s1 + $0x560] sm:$0x3f]
    %v191 = vld [vmem:[%s1 + $0x568] sm:$0x3f]
    %v192 = vld [vmem:[%s1 + $0x570] sm:$0x3f]
    %v193 = vld [vmem:[%s1 + $0x578] sm:$0x3f]
    %v194 = vld [vmem:[%s1 + $0x580] sm:$0x3f]
    %v195 = vld [vmem:[%s1 + $0x588] sm:$0x3f]
    %v196 = vld [vmem:[%s1 + $0x590] sm:$0x3f]
    %v197 = vld [vmem:[%s1 + $0x598] sm:$0x3f]
    %v198 = vld [vmem:[%s1 + $0x5a0] sm:$0x3f]
    %v199 = vld [vmem:[%s1 + $0x5a8] sm:$0x3f]
    %v200 = vld [vmem:[%s1 + $0x5b0] sm:$0x3f]
    %v201 = vld [vmem:[%s1 + $0x5b8] sm:$0x3f]
    %v202 = vld [vmem:[%s1 + $0x5c0] sm:$0x3f]
    %v203 = vld [vmem:[%s1 + $0x5c8] sm:$0x3f]
    %v204 = vld [vmem:[%s1 + $0x5d0] sm:$0x3f]
    %v205 = vld [vmem:[%s2] sm:$0x1]
    %v209 = vlaneseq
    %v210 = vshrl.u32 %v209, 7
    %v211 = vsub.s32 0, %v210
    %v212 = vrot.slane %v15, %v211
    %v213 = vlaneseq
    %v214 = vshrl.u32 %v213, 7
    %v215 = vsub.s32 1, %v214
    %v216 = vrot.slane %v15, %v215
    %v217 = vlaneseq
    %v218 = vshrl.u32 %v217, 7
    %v219 = vsub.s32 2, %v218
    %v220 = vrot.slane %v15, %v219
    %v221 = vlaneseq
    %v222 = vshrl.u32 %v221, 7
    %v223 = vsub.s32 3, %v222
    %v224 = vrot.slane %v15, %v223
    %v225 = vlaneseq
    %v226 = vshrl.u32 %v225, 7
    %v227 = vsub.s32 4, %v226
    %v228 = vrot.slane %v15, %v227
    %v229 = vlaneseq
    %v230 = vshrl.u32 %v229, 7
    %v231 = vsub.s32 5, %v230
    %v232 = vrot.slane %v15, %v231
    %v233 = vlaneseq
    %v234 = vshrl.u32 %v233, 7
    %v235 = vsub.s32 6, %v234
    %v236 = vrot.slane %v15, %v235
    %v237 = vlaneseq
    %v238 = vshrl.u32 %v237, 7
    %v239 = vsub.s32 7, %v238
    %v240 = vrot.slane %v15, %v239
    %v241 = vlaneseq
    %v242 = vshrl.u32 %v241, 7
    %v243 = vsub.s32 0, %v242
    %v244 = vrot.slane %v16, %v243
    %v245 = vlaneseq
    %v246 = vshrl.u32 %v245, 7
    %v247 = vsub.s32 1, %v246
    %v248 = vrot.slane %v16, %v247
    %v249 = vlaneseq
    %v250 = vshrl.u32 %v249, 7
    %v251 = vsub.s32 2, %v250
    %v252 = vrot.slane %v16, %v251
    %v253 = vlaneseq
    %v254 = vshrl.u32 %v253, 7
    %v255 = vsub.s32 3, %v254
    %v256 = vrot.slane %v16, %v255
    %v257 = vlaneseq
    %v258 = vshrl.u32 %v257, 7
    %v259 = vsub.s32 4, %v258
    %v260 = vrot.slane %v16, %v259
    %v261 = vlaneseq
    %v262 = vshrl.u32 %v261, 7
    %v263 = vsub.s32 5, %v262
    %v264 = vrot.slane %v16, %v263
    %v265 = vlaneseq
    %v266 = vshrl.u32 %v265, 7
    %v267 = vsub.s32 6, %v266
    %v268 = vrot.slane %v16, %v267
    %v269 = vlaneseq
    %v270 = vshrl.u32 %v269, 7
    %v271 = vsub.s32 7, %v270
    %v272 = vrot.slane %v16, %v271
    %v273 = vlaneseq
    %v274 = vshrl.u32 %v273, 7
    %v275 = vsub.s32 0, %v274
    %v276 = vrot.slane %v17, %v275
    %vm293 = vcmask 130048
    %v294 = vsel %vm293, %v276, 0
    %v297 = vsel %vm293, %v34, 0
    %v300 = vsel %vm293, %v51, 0
    %v303 = vsel %vm293, %v68, 0
    %v306 = vsel %vm293, %v85, 0
    %v309 = vsel %vm293, %v102, 0
    %v312 = vsel %vm293, %v119, 0
    %v315 = vsel %vm293, %v136, 0
    %v318 = vsel %vm293, %v153, 0
    %v321 = vsel %vm293, %v170, 0
    %v324 = vsel %vm293, %v187, 0
    %v327 = vsel %vm293, %v204, 0
    %329 = vmatprep.subr.mxu0 %v19
    %330 = vmatpush1.xpose.msra.mxu0 %v18
    %331 = vmatprep.subr.mxu0 %v36
    %332 = vmatpush1.xpose.msra.mxu0 %v35
    %333 = vmatprep.subr.mxu0 %v53
    %334 = vmatpush1.xpose.msra.mxu0 %v52
    %335 = vmatprep.subr.mxu0 %v70
    %336 = vmatpush1.xpose.msra.mxu0 %v69
    %337 = vmatprep.subr.mxu0 %v87
    %338 = vmatpush1.xpose.msra.mxu0 %v86
    %339 = vmatprep.subr.mxu0 %v104
    %340 = vmatpush1.xpose.msra.mxu0 %v103
    %341 = vmatprep.subr.mxu0 %v121
    %342 = vmatpush1.xpose.msra.mxu0 %v120
    %343 = vmatprep.subr.mxu0 %v138
    %344 = vmatpush1.xpose.msra.mxu0 %v137
    %345 = vmatprep.subr.mxu0 %v155
    %346 = vmatpush1.xpose.msra.mxu0 %v154
    %347 = vmatprep.subr.mxu0 %v172
    %348 = vmatpush1.xpose.msra.mxu0 %v171
    %349 = vmatprep.subr.mxu0 %v189
    %350 = vmatpush1.xpose.msra.mxu0 %v188
    %351 = vmatprep.subr.mxu0 0.0
    %352 = vmatpush1.xpose.msra.mxu0 0.0
    %353 = vmatprep.subr.mxu0 0.0
    %354 = vmatpush1.xpose.msra.mxu0 0.0
    %355 = vmatprep.subr.mxu0 0.0
    %356 = vmatpush1.xpose.msra.mxu0 0.0
    %357 = vmatprep.subr.mxu0 0.0
    %358 = vmatpush1.xpose.msra.mxu0 0.0
    %359 = vmatprep.subr.mxu0 0.0
    %360 = vmatpush1.xpose.msra.mxu0 0.0
    %361 = vmatprep.subr.mxu0 0.0
    %362 = vmatpush1.xpose.msra.mxu0 0.0
    %363 = vmatprep.subr.mxu0 0.0
    %364 = vmatpush1.xpose.msra.mxu0 0.0
    %365 = vmatprep.subr.mxu0 0.0
    %366 = vmatpush1.xpose.msra.mxu0 0.0
    %367 = vmatprep.subr.mxu0 0.0
    %368 = vmatpush1.xpose.msra.mxu0 0.0
    %369 = vmatprep.subr.mxu0 0.0
    %370 = vmatpush1.xpose.msra.mxu0 0.0
    %371 = vmatprep.subr.mxu0 0.0
    %372 = vmatpush1.xpose.msra.mxu0 0.0
    %373 = vmatprep.subr.mxu0 0.0
    %374 = vmatpush1.xpose.msra.mxu0 0.0
    %375 = vmatprep.subr.mxu0 0.0
    %376 = vmatpush1.xpose.msra.mxu0 0.0
    %377 = vmatprep.subr.mxu0 0.0
    %378 = vmatpush1.xpose.msra.mxu0 0.0
    %379 = vmatprep.subr.mxu0 0.0
    %380 = vmatpush1.xpose.msra.mxu0 0.0
    %381 = vmatprep.subr.mxu0 0.0
    %382 = vmatpush1.xpose.msra.mxu0 0.0
    %383 = vmatprep.subr.mxu0 0.0
    %384 = vmatpush1.xpose.msra.mxu0 0.0
    %385 = vmatprep.subr.mxu0 0.0
    %386 = vmatpush1.xpose.msra.mxu0 0.0
    %387 = vmatprep.subr.mxu0 0.0
    %388 = vmatpush1.xpose.msra.mxu0 0.0
    %389 = vmatprep.subr.mxu0 0.0
    %390 = vmatpush1.xpose.msra.mxu0 0.0
    %391 = vmatprep.subr.mxu0 0.0
    %392 = vmatpush1.xpose.msra.mxu0 0.0
    %393 = vmatprep.mubr.f32.mxu0 %v216
    %394 = vmatmul.mubr.f32.gmra.mrb[0].mxu0 %v212
    %v395 = vpop.f32.mrb[0].mxu0
    %v396 = vadd.f32 %v205, %v395
    %v397 = vpop.f32.mrb[0].mxu0
    %398 = vdwg.mxu0
    %399 = vmatprep.subr.mxu0 %v21
    %400 = vmatpush1.xpose.msra.mxu0 %v20
    %401 = vmatprep.subr.mxu0 %v38
    %402 = vmatpush1.xpose.msra.mxu0 %v37
    %403 = vmatprep.subr.mxu0 %v55
    %404 = vmatpush1.xpose.msra.mxu0 %v54
    %405 = vmatprep.subr.mxu0 %v72
    %406 = vmatpush1.xpose.msra.mxu0 %v71
    %407 = vmatprep.subr.mxu0 %v89
    %408 = vmatpush1.xpose.msra.mxu0 %v88
    %409 = vmatprep.subr.mxu0 %v106
    %410 = vmatpush1.xpose.msra.mxu0 %v105
    %411 = vmatprep.subr.mxu0 %v123
    %412 = vmatpush1.xpose.msra.mxu0 %v122
    %413 = vmatprep.subr.mxu0 %v140
    %414 = vmatpush1.xpose.msra.mxu0 %v139
    %415 = vmatprep.subr.mxu0 %v157
    %416 = vmatpush1.xpose.msra.mxu0 %v156
    %417 = vmatprep.subr.mxu0 %v174
    %418 = vmatpush1.xpose.msra.mxu0 %v173
    %419 = vmatprep.subr.mxu0 %v191
    %420 = vmatpush1.xpose.msra.mxu0 %v190
    %421 = vmatprep.subr.mxu0 0.0
    %422 = vmatpush1.xpose.msra.mxu0 0.0
    %423 = vmatprep.subr.mxu0 0.0
    %424 = vmatpush1.xpose.msra.mxu0 0.0
    %425 = vmatprep.subr.mxu0 0.0
    %426 = vmatpush1.xpose.msra.mxu0 0.0
    %427 = vmatprep.subr.mxu0 0.0
    %428 = vmatpush1.xpose.msra.mxu0 0.0
    %429 = vmatprep.subr.mxu0 0.0
    %430 = vmatpush1.xpose.msra.mxu0 0.0
    %431 = vmatprep.subr.mxu0 0.0
    %432 = vmatpush1.xpose.msra.mxu0 0.0
    %433 = vmatprep.subr.mxu0 0.0
    %434 = vmatpush1.xpose.msra.mxu0 0.0
    %435 = vmatprep.subr.mxu0 0.0
    %436 = vmatpush1.xpose.msra.mxu0 0.0
    %437 = vmatprep.subr.mxu0 0.0
    %438 = vmatpush1.xpose.msra.mxu0 0.0
    %439 = vmatprep.subr.mxu0 0.0
    %440 = vmatpush1.xpose.msra.mxu0 0.0
    %441 = vmatprep.subr.mxu0 0.0
    %442 = vmatpush1.xpose.msra.mxu0 0.0
    %443 = vmatprep.subr.mxu0 0.0
    %444 = vmatpush1.xpose.msra.mxu0 0.0
    %445 = vmatprep.subr.mxu0 0.0
    %446 = vmatpush1.xpose.msra.mxu0 0.0
    %447 = vmatprep.subr.mxu0 0.0
    %448 = vmatpush1.xpose.msra.mxu0 0.0
    %449 = vmatprep.subr.mxu0 0.0
    %450 = vmatpush1.xpose.msra.mxu0 0.0
    %451 = vmatprep.subr.mxu0 0.0
    %452 = vmatpush1.xpose.msra.mxu0 0.0
    %453 = vmatprep.subr.mxu0 0.0
    %454 = vmatpush1.xpose.msra.mxu0 0.0
    %455 = vmatprep.subr.mxu0 0.0
    %456 = vmatpush1.xpose.msra.mxu0 0.0
    %457 = vmatprep.subr.mxu0 0.0
    %458 = vmatpush1.xpose.msra.mxu0 0.0
    %459 = vmatprep.subr.mxu0 0.0
    %460 = vmatpush1.xpose.msra.mxu0 0.0
    %461 = vmatprep.subr.mxu0 0.0
    %462 = vmatpush1.xpose.msra.mxu0 0.0
    %463 = vmatprep.mubr.f32.mxu0 %v224
    %464 = vmatmul.mubr.f32.gmra.mrb[0].mxu0 %v220
    %v465 = vpop.f32.mrb[0].mxu0
    %v466 = vadd.f32 %v396, %v465
    %v467 = vpop.f32.mrb[0].mxu0
    %468 = vdwg.mxu0
    %469 = vmatprep.subr.mxu0 %v23
    %470 = vmatpush1.xpose.msra.mxu0 %v22
    %471 = vmatprep.subr.mxu0 %v40
    %472 = vmatpush1.xpose.msra.mxu0 %v39
    %473 = vmatprep.subr.mxu0 %v57
    %474 = vmatpush1.xpose.msra.mxu0 %v56
    %475 = vmatprep.subr.mxu0 %v74
    %476 = vmatpush1.xpose.msra.mxu0 %v73
    %477 = vmatprep.subr.mxu0 %v91
    %478 = vmatpush1.xpose.msra.mxu0 %v90
    %479 = vmatprep.subr.mxu0 %v108
    %480 = vmatpush1.xpose.msra.mxu0 %v107
    %481 = vmatprep.subr.mxu0 %v125
    %482 = vmatpush1.xpose.msra.mxu0 %v124
    %483 = vmatprep.subr.mxu0 %v142
    %484 = vmatpush1.xpose.msra.mxu0 %v141
    %485 = vmatprep.subr.mxu0 %v159
    %486 = vmatpush1.xpose.msra.mxu0 %v158
    %487 = vmatprep.subr.mxu0 %v176
    %488 = vmatpush1.xpose.msra.mxu0 %v175
    %489 = vmatprep.subr.mxu0 %v193
    %490 = vmatpush1.xpose.msra.mxu0 %v192
    %491 = vmatprep.subr.mxu0 0.0
    %492 = vmatpush1.xpose.msra.mxu0 0.0
    %493 = vmatprep.subr.mxu0 0.0
    %494 = vmatpush1.xpose.msra.mxu0 0.0
    %495 = vmatprep.subr.mxu0 0.0
    %496 = vmatpush1.xpose.msra.mxu0 0.0
    %497 = vmatprep.subr.mxu0 0.0
    %498 = vmatpush1.xpose.msra.mxu0 0.0
    %499 = vmatprep.subr.mxu0 0.0
    %500 = vmatpush1.xpose.msra.mxu0 0.0
    %501 = vmatprep.subr.mxu0 0.0
    %502 = vmatpush1.xpose.msra.mxu0 0.0
    %503 = vmatprep.subr.mxu0 0.0
    %504 = vmatpush1.xpose.msra.mxu0 0.0
    %505 = vmatprep.subr.mxu0 0.0
    %506 = vmatpush1.xpose.msra.mxu0 0.0
    %507 = vmatprep.subr.mxu0 0.0
    %508 = vmatpush1.xpose.msra.mxu0 0.0
    %509 = vmatprep.subr.mxu0 0.0
    %510 = vmatpush1.xpose.msra.mxu0 0.0
    %511 = vmatprep.subr.mxu0 0.0
    %512 = vmatpush1.xpose.msra.mxu0 0.0
    %513 = vmatprep.subr.mxu0 0.0
    %514 = vmatpush1.xpose.msra.mxu0 0.0
    %515 = vmatprep.subr.mxu0 0.0
    %516 = vmatpush1.xpose.msra.mxu0 0.0
    %517 = vmatprep.subr.mxu0 0.0
    %518 = vmatpush1.xpose.msra.mxu0 0.0
    %519 = vmatprep.subr.mxu0 0.0
    %520 = vmatpush1.xpose.msra.mxu0 0.0
    %521 = vmatprep.subr.mxu0 0.0
    %522 = vmatpush1.xpose.msra.mxu0 0.0
    %523 = vmatprep.subr.mxu0 0.0
    %524 = vmatpush1.xpose.msra.mxu0 0.0
    %525 = vmatprep.subr.mxu0 0.0
    %526 = vmatpush1.xpose.msra.mxu0 0.0
    %527 = vmatprep.subr.mxu0 0.0
    %528 = vmatpush1.xpose.msra.mxu0 0.0
    %529 = vmatprep.subr.mxu0 0.0
    %530 = vmatpush1.xpose.msra.mxu0 0.0
    %531 = vmatprep.subr.mxu0 0.0
    %532 = vmatpush1.xpose.msra.mxu0 0.0
    %533 = vmatprep.mubr.f32.mxu0 %v232
    %534 = vmatmul.mubr.f32.gmra.mrb[0].mxu0 %v228
    %v535 = vpop.f32.mrb[0].mxu0
    %v536 = vadd.f32 %v466, %v535
    %v537 = vpop.f32.mrb[0].mxu0
    %538 = vdwg.mxu0
    %539 = vmatprep.subr.mxu0 %v25
    %540 = vmatpush1.xpose.msra.mxu0 %v24
    %541 = vmatprep.subr.mxu0 %v42
    %542 = vmatpush1.xpose.msra.mxu0 %v41
    %543 = vmatprep.subr.mxu0 %v59
    %544 = vmatpush1.xpose.msra.mxu0 %v58
    %545 = vmatprep.subr.mxu0 %v76
    %546 = vmatpush1.xpose.msra.mxu0 %v75
    %547 = vmatprep.subr.mxu0 %v93
    %548 = vmatpush1.xpose.msra.mxu0 %v92
    %549 = vmatprep.subr.mxu0 %v110
    %550 = vmatpush1.xpose.msra.mxu0 %v109
    %551 = vmatprep.subr.mxu0 %v127
    %552 = vmatpush1.xpose.msra.mxu0 %v126
    %553 = vmatprep.subr.mxu0 %v144
    %554 = vmatpush1.xpose.msra.mxu0 %v143
    %555 = vmatprep.subr.mxu0 %v161
    %556 = vmatpush1.xpose.msra.mxu0 %v160
    %557 = vmatprep.subr.mxu0 %v178
    %558 = vmatpush1.xpose.msra.mxu0 %v177
    %559 = vmatprep.subr.mxu0 %v195
    %560 = vmatpush1.xpose.msra.mxu0 %v194
    %561 = vmatprep.subr.mxu0 0.0
    %562 = vmatpush1.xpose.msra.mxu0 0.0
    %563 = vmatprep.subr.mxu0 0.0
    %564 = vmatpush1.xpose.msra.mxu0 0.0
    %565 = vmatprep.subr.mxu0 0.0
    %566 = vmatpush1.xpose.msra.mxu0 0.0
    %567 = vmatprep.subr.mxu0 0.0
    %568 = vmatpush1.xpose.msra.mxu0 0.0
    %569 = vmatprep.subr.mxu0 0.0
    %570 = vmatpush1.xpose.msra.mxu0 0.0
    %571 = vmatprep.subr.mxu0 0.0
    %572 = vmatpush1.xpose.msra.mxu0 0.0
    %573 = vmatprep.subr.mxu0 0.0
    %574 = vmatpush1.xpose.msra.mxu0 0.0
    %575 = vmatprep.subr.mxu0 0.0
    %576 = vmatpush1.xpose.msra.mxu0 0.0
    %577 = vmatprep.subr.mxu0 0.0
    %578 = vmatpush1.xpose.msra.mxu0 0.0
    %579 = vmatprep.subr.mxu0 0.0
    %580 = vmatpush1.xpose.msra.mxu0 0.0
    %581 = vmatprep.subr.mxu0 0.0
    %582 = vmatpush1.xpose.msra.mxu0 0.0
    %583 = vmatprep.subr.mxu0 0.0
    %584 = vmatpush1.xpose.msra.mxu0 0.0
    %585 = vmatprep.subr.mxu0 0.0
    %586 = vmatpush1.xpose.msra.mxu0 0.0
    %587 = vmatprep.subr.mxu0 0.0
    %588 = vmatpush1.xpose.msra.mxu0 0.0
    %589 = vmatprep.subr.mxu0 0.0
    %590 = vmatpush1.xpose.msra.mxu0 0.0
    %591 = vmatprep.subr.mxu0 0.0
    %592 = vmatpush1.xpose.msra.mxu0 0.0
    %593 = vmatprep.subr.mxu0 0.0
    %594 = vmatpush1.xpose.msra.mxu0 0.0
    %595 = vmatprep.subr.mxu0 0.0
    %596 = vmatpush1.xpose.msra.mxu0 0.0
    %597 = vmatprep.subr.mxu0 0.0
    %598 = vmatpush1.xpose.msra.mxu0 0.0
    %599 = vmatprep.subr.mxu0 0.0
    %600 = vmatpush1.xpose.msra.mxu0 0.0
    %601 = vmatprep.subr.mxu0 0.0
    %602 = vmatpush1.xpose.msra.mxu0 0.0
    %603 = vmatprep.mubr.f32.mxu0 %v240
    %604 = vmatmul.mubr.f32.gmra.mrb[0].mxu0 %v236
    %v605 = vpop.f32.mrb[0].mxu0
    %v606 = vadd.f32 %v536, %v605
    %v607 = vpop.f32.mrb[0].mxu0
    %608 = vdwg.mxu0
    %609 = vmatprep.subr.mxu0 %v27
    %610 = vmatpush1.xpose.msra.mxu0 %v26
    %611 = vmatprep.subr.mxu0 %v44
    %612 = vmatpush1.xpose.msra.mxu0 %v43
    %613 = vmatprep.subr.mxu0 %v61
    %614 = vmatpush1.xpose.msra.mxu0 %v60
    %615 = vmatprep.subr.mxu0 %v78
    %616 = vmatpush1.xpose.msra.mxu0 %v77
    %617 = vmatprep.subr.mxu0 %v95
    %618 = vmatpush1.xpose.msra.mxu0 %v94
    %619 = vmatprep.subr.mxu0 %v112
    %620 = vmatpush1.xpose.msra.mxu0 %v111
    %621 = vmatprep.subr.mxu0 %v129
    %622 = vmatpush1.xpose.msra.mxu0 %v128
    %623 = vmatprep.subr.mxu0 %v146
    %624 = vmatpush1.xpose.msra.mxu0 %v145
    %625 = vmatprep.subr.mxu0 %v163
    %626 = vmatpush1.xpose.msra.mxu0 %v162
    %627 = vmatprep.subr.mxu0 %v180
    %628 = vmatpush1.xpose.msra.mxu0 %v179
    %629 = vmatprep.subr.mxu0 %v197
    %630 = vmatpush1.xpose.msra.mxu0 %v196
    %631 = vmatprep.subr.mxu0 0.0
    %632 = vmatpush1.xpose.msra.mxu0 0.0
    %633 = vmatprep.subr.mxu0 0.0
    %634 = vmatpush1.xpose.msra.mxu0 0.0
    %635 = vmatprep.subr.mxu0 0.0
    %636 = vmatpush1.xpose.msra.mxu0 0.0
    %637 = vmatprep.subr.mxu0 0.0
    %638 = vmatpush1.xpose.msra.mxu0 0.0
    %639 = vmatprep.subr.mxu0 0.0
    %640 = vmatpush1.xpose.msra.mxu0 0.0
    %641 = vmatprep.subr.mxu0 0.0
    %642 = vmatpush1.xpose.msra.mxu0 0.0
    %643 = vmatprep.subr.mxu0 0.0
    %644 = vmatpush1.xpose.msra.mxu0 0.0
    %645 = vmatprep.subr.mxu0 0.0
    %646 = vmatpush1.xpose.msra.mxu0 0.0
    %647 = vmatprep.subr.mxu0 0.0
    %648 = vmatpush1.xpose.msra.mxu0 0.0
    %649 = vmatprep.subr.mxu0 0.0
    %650 = vmatpush1.xpose.msra.mxu0 0.0
    %651 = vmatprep.subr.mxu0 0.0
    %652 = vmatpush1.xpose.msra.mxu0 0.0
    %653 = vmatprep.subr.mxu0 0.0
    %654 = vmatpush1.xpose.msra.mxu0 0.0
    %655 = vmatprep.subr.mxu0 0.0
    %656 = vmatpush1.xpose.msra.mxu0 0.0
    %657 = vmatprep.subr.mxu0 0.0
    %658 = vmatpush1.xpose.msra.mxu0 0.0
    %659 = vmatprep.subr.mxu0 0.0
    %660 = vmatpush1.xpose.msra.mxu0 0.0
    %661 = vmatprep.subr.mxu0 0.0
    %662 = vmatpush1.xpose.msra.mxu0 0.0
    %663 = vmatprep.subr.mxu0 0.0
    %664 = vmatpush1.xpose.msra.mxu0 0.0
    %665 = vmatprep.subr.mxu0 0.0
    %666 = vmatpush1.xpose.msra.mxu0 0.0
    %667 = vmatprep.subr.mxu0 0.0
    %668 = vmatpush1.xpose.msra.mxu0 0.0
    %669 = vmatprep.subr.mxu0 0.0
    %670 = vmatpush1.xpose.msra.mxu0 0.0
    %671 = vmatprep.subr.mxu0 0.0
    %672 = vmatpush1.xpose.msra.mxu0 0.0
    %673 = vmatprep.mubr.f32.mxu0 %v248
    %674 = vmatmul.mubr.f32.gmra.mrb[0].mxu0 %v244
    %v675 = vpop.f32.mrb[0].mxu0
    %v676 = vadd.f32 %v606, %v675
    %v677 = vpop.f32.mrb[0].mxu0
    %678 = vdwg.mxu0
    %679 = vmatprep.subr.mxu0 %v29
    %680 = vmatpush1.xpose.msra.mxu0 %v28
    %681 = vmatprep.subr.mxu0 %v46
    %682 = vmatpush1.xpose.msra.mxu0 %v45
    %683 = vmatprep.subr.mxu0 %v63
    %684 = vmatpush1.xpose.msra.mxu0 %v62
    %685 = vmatprep.subr.mxu0 %v80
    %686 = vmatpush1.xpose.msra.mxu0 %v79
    %687 = vmatprep.subr.mxu0 %v97
    %688 = vmatpush1.xpose.msra.mxu0 %v96
    %689 = vmatprep.subr.mxu0 %v114
    %690 = vmatpush1.xpose.msra.mxu0 %v113
    %691 = vmatprep.subr.mxu0 %v131
    %692 = vmatpush1.xpose.msra.mxu0 %v130
    %693 = vmatprep.subr.mxu0 %v148
    %694 = vmatpush1.xpose.msra.mxu0 %v147
    %695 = vmatprep.subr.mxu0 %v165
    %696 = vmatpush1.xpose.msra.mxu0 %v164
    %697 = vmatprep.subr.mxu0 %v182
    %698 = vmatpush1.xpose.msra.mxu0 %v181
    %699 = vmatprep.subr.mxu0 %v199
    %700 = vmatpush1.xpose.msra.mxu0 %v198
    %701 = vmatprep.subr.mxu0 0.0
    %702 = vmatpush1.xpose.msra.mxu0 0.0
    %703 = vmatprep.subr.mxu0 0.0
    %704 = vmatpush1.xpose.msra.mxu0 0.0
    %705 = vmatprep.subr.mxu0 0.0
    %706 = vmatpush1.xpose.msra.mxu0 0.0
    %707 = vmatprep.subr.mxu0 0.0
    %708 = vmatpush1.xpose.msra.mxu0 0.0
    %709 = vmatprep.subr.mxu0 0.0
    %710 = vmatpush1.xpose.msra.mxu0 0.0
    %711 = vmatprep.subr.mxu0 0.0
    %712 = vmatpush1.xpose.msra.mxu0 0.0
    %713 = vmatprep.subr.mxu0 0.0
    %714 = vmatpush1.xpose.msra.mxu0 0.0
    %715 = vmatprep.subr.mxu0 0.0
    %716 = vmatpush1.xpose.msra.mxu0 0.0
    %717 = vmatprep.subr.mxu0 0.0
    %718 = vmatpush1.xpose.msra.mxu0 0.0
    %719 = vmatprep.subr.mxu0 0.0
    %720 = vmatpush1.xpose.msra.mxu0 0.0
    %721 = vmatprep.subr.mxu0 0.0
    %722 = vmatpush1.xpose.msra.mxu0 0.0
    %723 = vmatprep.subr.mxu0 0.0
    %724 = vmatpush1.xpose.msra.mxu0 0.0
    %725 = vmatprep.subr.mxu0 0.0
    %726 = vmatpush1.xpose.msra.mxu0 0.0
    %727 = vmatprep.subr.mxu0 0.0
    %728 = vmatpush1.xpose.msra.mxu0 0.0
    %729 = vmatprep.subr.mxu0 0.0
    %730 = vmatpush1.xpose.msra.mxu0 0.0
    %731 = vmatprep.subr.mxu0 0.0
    %732 = vmatpush1.xpose.msra.mxu0 0.0
    %733 = vmatprep.subr.mxu0 0.0
    %734 = vmatpush1.xpose.msra.mxu0 0.0
    %735 = vmatprep.subr.mxu0 0.0
    %736 = vmatpush1.xpose.msra.mxu0 0.0
    %737 = vmatprep.subr.mxu0 0.0
    %738 = vmatpush1.xpose.msra.mxu0 0.0
    %739 = vmatprep.subr.mxu0 0.0
    %740 = vmatpush1.xpose.msra.mxu0 0.0
    %741 = vmatprep.subr.mxu0 0.0
    %742 = vmatpush1.xpose.msra.mxu0 0.0
    %743 = vmatprep.mubr.f32.mxu0 %v256
    %744 = vmatmul.mubr.f32.gmra.mrb[0].mxu0 %v252
    %v745 = vpop.f32.mrb[0].mxu0
    %v746 = vadd.f32 %v676, %v745
    %v747 = vpop.f32.mrb[0].mxu0
    %748 = vdwg.mxu0
    %749 = vmatprep.subr.mxu0 %v31
    %750 = vmatpush1.xpose.msra.mxu0 %v30
    %751 = vmatprep.subr.mxu0 %v48
    %752 = vmatpush1.xpose.msra.mxu0 %v47
    %753 = vmatprep.subr.mxu0 %v65
    %754 = vmatpush1.xpose.msra.mxu0 %v64
    %755 = vmatprep.subr.mxu0 %v82
    %756 = vmatpush1.xpose.msra.mxu0 %v81
    %757 = vmatprep.subr.mxu0 %v99
    %758 = vmatpush1.xpose.msra.mxu0 %v98
    %759 = vmatprep.subr.mxu0 %v116
    %760 = vmatpush1.xpose.msra.mxu0 %v115
    %761 = vmatprep.subr.mxu0 %v133
    %762 = vmatpush1.xpose.msra.mxu0 %v132
    %763 = vmatprep.subr.mxu0 %v150
    %764 = vmatpush1.xpose.msra.mxu0 %v149
    %765 = vmatprep.subr.mxu0 %v167
    %766 = vmatpush1.xpose.msra.mxu0 %v166
    %767 = vmatprep.subr.mxu0 %v184
    %768 = vmatpush1.xpose.msra.mxu0 %v183
    %769 = vmatprep.subr.mxu0 %v201
    %770 = vmatpush1.xpose.msra.mxu0 %v200
    %771 = vmatprep.subr.mxu0 0.0
    %772 = vmatpush1.xpose.msra.mxu0 0.0
    %773 = vmatprep.subr.mxu0 0.0
    %774 = vmatpush1.xpose.msra.mxu0 0.0
    %775 = vmatprep.subr.mxu0 0.0
    %776 = vmatpush1.xpose.msra.mxu0 0.0
    %777 = vmatprep.subr.mxu0 0.0
    %778 = vmatpush1.xpose.msra.mxu0 0.0
    %779 = vmatprep.subr.mxu0 0.0
    %780 = vmatpush1.xpose.msra.mxu0 0.0
    %781 = vmatprep.subr.mxu0 0.0
    %782 = vmatpush1.xpose.msra.mxu0 0.0
    %783 = vmatprep.subr.mxu0 0.0
    %784 = vmatpush1.xpose.msra.mxu0 0.0
    %785 = vmatprep.subr.mxu0 0.0
    %786 = vmatpush1.xpose.msra.mxu0 0.0
    %787 = vmatprep.subr.mxu0 0.0
    %788 = vmatpush1.xpose.msra.mxu0 0.0
    %789 = vmatprep.subr.mxu0 0.0
    %790 = vmatpush1.xpose.msra.mxu0 0.0
    %791 = vmatprep.subr.mxu0 0.0
    %792 = vmatpush1.xpose.msra.mxu0 0.0
    %793 = vmatprep.subr.mxu0 0.0
    %794 = vmatpush1.xpose.msra.mxu0 0.0
    %795 = vmatprep.subr.mxu0 0.0
    %796 = vmatpush1.xpose.msra.mxu0 0.0
    %797 = vmatprep.subr.mxu0 0.0
    %798 = vmatpush1.xpose.msra.mxu0 0.0
    %799 = vmatprep.subr.mxu0 0.0
    %800 = vmatpush1.xpose.msra.mxu0 0.0
    %801 = vmatprep.subr.mxu0 0.0
    %802 = vmatpush1.xpose.msra.mxu0 0.0
    %803 = vmatprep.subr.mxu0 0.0
    %804 = vmatpush1.xpose.msra.mxu0 0.0
    %805 = vmatprep.subr.mxu0 0.0
    %806 = vmatpush1.xpose.msra.mxu0 0.0
    %807 = vmatprep.subr.mxu0 0.0
    %808 = vmatpush1.xpose.msra.mxu0 0.0
    %809 = vmatprep.subr.mxu0 0.0
    %810 = vmatpush1.xpose.msra.mxu0 0.0
    %811 = vmatprep.subr.mxu0 0.0
    %812 = vmatpush1.xpose.msra.mxu0 0.0
    %813 = vmatprep.mubr.f32.mxu0 %v264
    %814 = vmatmul.mubr.f32.gmra.mrb[0].mxu0 %v260
    %v815 = vpop.f32.mrb[0].mxu0
    %v816 = vadd.f32 %v746, %v815
    %v817 = vpop.f32.mrb[0].mxu0
    %818 = vdwg.mxu0
    %819 = vmatprep.subr.mxu0 %v33
    %820 = vmatpush1.xpose.msra.mxu0 %v32
    %821 = vmatprep.subr.mxu0 %v50
    %822 = vmatpush1.xpose.msra.mxu0 %v49
    %823 = vmatprep.subr.mxu0 %v67
    %824 = vmatpush1.xpose.msra.mxu0 %v66
    %825 = vmatprep.subr.mxu0 %v84
    %826 = vmatpush1.xpose.msra.mxu0 %v83
    %827 = vmatprep.subr.mxu0 %v101
    %828 = vmatpush1.xpose.msra.mxu0 %v100
    %829 = vmatprep.subr.mxu0 %v118
    %830 = vmatpush1.xpose.msra.mxu0 %v117
    %831 = vmatprep.subr.mxu0 %v135
    %832 = vmatpush1.xpose.msra.mxu0 %v134
    %833 = vmatprep.subr.mxu0 %v152
    %834 = vmatpush1.xpose.msra.mxu0 %v151
    %835 = vmatprep.subr.mxu0 %v169
    %836 = vmatpush1.xpose.msra.mxu0 %v168
    %837 = vmatprep.subr.mxu0 %v186
    %838 = vmatpush1.xpose.msra.mxu0 %v185
    %839 = vmatprep.subr.mxu0 %v203
    %840 = vmatpush1.xpose.msra.mxu0 %v202
    %841 = vmatprep.subr.mxu0 0.0
    %842 = vmatpush1.xpose.msra.mxu0 0.0
    %843 = vmatprep.subr.mxu0 0.0
    %844 = vmatpush1.xpose.msra.mxu0 0.0
    %845 = vmatprep.subr.mxu0 0.0
    %846 = vmatpush1.xpose.msra.mxu0 0.0
    %847 = vmatprep.subr.mxu0 0.0
    %848 = vmatpush1.xpose.msra.mxu0 0.0
    %849 = vmatprep.subr.mxu0 0.0
    %850 = vmatpush1.xpose.msra.mxu0 0.0
    %851 = vmatprep.subr.mxu0 0.0
    %852 = vmatpush1.xpose.msra.mxu0 0.0
    %853 = vmatprep.subr.mxu0 0.0
    %854 = vmatpush1.xpose.msra.mxu0 0.0
    %855 = vmatprep.subr.mxu0 0.0
    %856 = vmatpush1.xpose.msra.mxu0 0.0
    %857 = vmatprep.subr.mxu0 0.0
    %858 = vmatpush1.xpose.msra.mxu0 0.0
    %859 = vmatprep.subr.mxu0 0.0
    %860 = vmatpush1.xpose.msra.mxu0 0.0
    %861 = vmatprep.subr.mxu0 0.0
    %862 = vmatpush1.xpose.msra.mxu0 0.0
    %863 = vmatprep.subr.mxu0 0.0
    %864 = vmatpush1.xpose.msra.mxu0 0.0
    %865 = vmatprep.subr.mxu0 0.0
    %866 = vmatpush1.xpose.msra.mxu0 0.0
    %867 = vmatprep.subr.mxu0 0.0
    %868 = vmatpush1.xpose.msra.mxu0 0.0
    %869 = vmatprep.subr.mxu0 0.0
    %870 = vmatpush1.xpose.msra.mxu0 0.0
    %871 = vmatprep.subr.mxu0 0.0
    %872 = vmatpush1.xpose.msra.mxu0 0.0
    %873 = vmatprep.subr.mxu0 0.0
    %874 = vmatpush1.xpose.msra.mxu0 0.0
    %875 = vmatprep.subr.mxu0 0.0
    %876 = vmatpush1.xpose.msra.mxu0 0.0
    %877 = vmatprep.subr.mxu0 0.0
    %878 = vmatpush1.xpose.msra.mxu0 0.0
    %879 = vmatprep.subr.mxu0 0.0
    %880 = vmatpush1.xpose.msra.mxu0 0.0
    %881 = vmatprep.subr.mxu0 0.0
    %882 = vmatpush1.xpose.msra.mxu0 0.0
    %883 = vmatprep.mubr.f32.mxu0 %v272
    %884 = vmatmul.mubr.f32.gmra.mrb[0].mxu0 %v268
    %v885 = vpop.f32.mrb[0].mxu0
    %v886 = vadd.f32 %v816, %v885
    %v887 = vpop.f32.mrb[0].mxu0
    %888 = vdwg.mxu0
    %889 = vmatprep.subr.mxu0 0.0
    %890 = vmatpush1.xpose.msra.mxu0 %v297
    %891 = vmatprep.subr.mxu0 0.0
    %892 = vmatpush1.xpose.msra.mxu0 %v300
    %893 = vmatprep.subr.mxu0 0.0
    %894 = vmatpush1.xpose.msra.mxu0 %v303
    %895 = vmatprep.subr.mxu0 0.0
    %896 = vmatpush1.xpose.msra.mxu0 %v306
    %897 = vmatprep.subr.mxu0 0.0
    %898 = vmatpush1.xpose.msra.mxu0 %v309
    %899 = vmatprep.subr.mxu0 0.0
    %900 = vmatpush1.xpose.msra.mxu0 %v312
    %901 = vmatprep.subr.mxu0 0.0
    %902 = vmatpush1.xpose.msra.mxu0 %v315
    %903 = vmatprep.subr.mxu0 0.0
    %904 = vmatpush1.xpose.msra.mxu0 %v318
    %905 = vmatprep.subr.mxu0 0.0
    %906 = vmatpush1.xpose.msra.mxu0 %v321
    %907 = vmatprep.subr.mxu0 0.0
    %908 = vmatpush1.xpose.msra.mxu0 %v324
    %909 = vmatprep.subr.mxu0 0.0
    %910 = vmatpush1.xpose.msra.mxu0 %v327
    %911 = vmatprep.subr.mxu0 0.0
    %912 = vmatpush1.xpose.msra.mxu0 0.0
    %913 = vmatprep.subr.mxu0 0.0
    %914 = vmatpush1.xpose.msra.mxu0 0.0
    %915 = vmatprep.subr.mxu0 0.0
    %916 = vmatpush1.xpose.msra.mxu0 0.0
    %917 = vmatprep.subr.mxu0 0.0
    %918 = vmatpush1.xpose.msra.mxu0 0.0
    %919 = vmatprep.subr.mxu0 0.0
    %920 = vmatpush1.xpose.msra.mxu0 0.0
    %921 = vmatprep.subr.mxu0 0.0
    %922 = vmatpush1.xpose.msra.mxu0 0.0
    %923 = vmatprep.subr.mxu0 0.0
    %924 = vmatpush1.xpose.msra.mxu0 0.0
    %925 = vmatprep.subr.mxu0 0.0
    %926 = vmatpush1.xpose.msra.mxu0 0.0
    %927 = vmatprep.subr.mxu0 0.0
    %928 = vmatpush1.xpose.msra.mxu0 0.0
    %929 = vmatprep.subr.mxu0 0.0
    %930 = vmatpush1.xpose.msra.mxu0 0.0
    %931 = vmatprep.subr.mxu0 0.0
    %932 = vmatpush1.xpose.msra.mxu0 0.0
    %933 = vmatprep.subr.mxu0 0.0
    %934 = vmatpush1.xpose.msra.mxu0 0.0
    %935 = vmatprep.subr.mxu0 0.0
    %936 = vmatpush1.xpose.msra.mxu0 0.0
    %937 = vmatprep.subr.mxu0 0.0
    %938 = vmatpush1.xpose.msra.mxu0 0.0
    %939 = vmatprep.subr.mxu0 0.0
    %940 = vmatpush1.xpose.msra.mxu0 0.0
    %941 = vmatprep.subr.mxu0 0.0
    %942 = vmatpush1.xpose.msra.mxu0 0.0
    %943 = vmatprep.subr.mxu0 0.0
    %944 = vmatpush1.xpose.msra.mxu0 0.0
    %945 = vmatprep.subr.mxu0 0.0
    %946 = vmatpush1.xpose.msra.mxu0 0.0
    %947 = vmatprep.subr.mxu0 0.0
    %948 = vmatpush1.xpose.msra.mxu0 0.0
    %949 = vmatprep.subr.mxu0 0.0
    %950 = vmatpush1.xpose.msra.mxu0 0.0
    %951 = vmatprep.subr.mxu0 0.0
    %952 = vmatpush1.xpose.msra.mxu0 0.0
    %953 = vmatprep.mubr.f32.mxu0 0.0
    %954 = vmatmul.mubr.f32.gmra.mrb[0].mxu0 %v294
    %v955 = vpop.f32.mrb[0].mxu0
    %v956 = vadd.f32 %v886, %v955
    %v957 = vpop.f32.mrb[0].mxu0
    %958 = vdwg.mxu0
    %vm959 = vcmask 696320
    %960 = vst.msk [vmem:[#allocation2] sm:$0x1] %vm959, %v956
    // Predicated region
    $region14: #{conv2d_1x1.1} parent=1 // pred_check
      _
    $region15: #{conv2d_1x1.1} parent=1 // pred_check_branch
      %962 = sbr.rel (0) target = $region17
    $region16: #{conv2d_1x1.1} parent=1 // pred_region
      %s964 = ssub.s32 16, 16
      %965 = vsyncadd [#allocation3], %s964
      %s967 = sshll.u32 [#allocation2], 4
      %s968 = int_to_ptr.vmem [resolvable:$true] %s967
      %970 = dma.vmem_to_hbm [thread:$0]  %s968, 16, %s3, [#allocation3]
    $region17: #{conv2d_1x1.1} parent=1 // pred_fallthru
      _
    // Predicated region
    $region18: #{conv2d_1x1.1} parent=1 // pred_check
      _
    $region19: #{conv2d_1x1.1} parent=1 // pred_check_branch
      %972 = sbr.rel (0) target = $region21
    $region20: #{conv2d_1x1.1} parent=1 // pred_region
      %973 = dma.done [#allocation3], 16
    $region21: #{conv2d_1x1.1} parent=1 // pred_fallthru
      _
    %974 = vsyncpa [#allocation3], 1

</llo_original>
